<compile_context>
chip_gen: v7x
topology: tpu7x:2x2x1
jax: 0.10.0
libtpu: 0.0.40
codegen_flags: <defaults>
</compile_context>

<pallas_src>
import functools
import math

import jax
import jax.numpy as jnp
from jax.experimental import pallas as pl
from jax.experimental.pallas import tpu as pltpu


# ----------------------------------------------------------------------------
# Kernel 1: block-circulant conv (one MXU matmul) + per-(channel, ring) sum /
#           sum-of-squares accumulation for BatchNorm statistics (no bias).
#           Grid: (B, J)  -- ("parallel", "arbitrary")
# ----------------------------------------------------------------------------
def _conv_stats_kernel(x_ref, w_ref, sum_ref, sq_ref):
    @pl.when(pl.program_id(1) == 0)
    def _():
        sum_ref[...] = jnp.zeros_like(sum_ref)
        sq_ref[...] = jnp.zeros_like(sq_ref)

    # x block is (1, K, tp); w is (K, K).  y[k_out, p] = raw conv output.
    y = jnp.dot(w_ref[...], x_ref[0], preferred_element_type=jnp.float32)
    sum_ref[0] += jnp.sum(y, axis=1, keepdims=True)      # (K, 1) lane reduce (XLU)
    sq_ref[0] += jnp.sum(y * y, axis=1, keepdims=True)   # (K, 1)


# ----------------------------------------------------------------------------
# Kernel 2: recompute conv with BN scale folded into the weight rows, add fused
#           bias/shift column, LeakyReLU(0.1).  Grid: (B, J) -- all "parallel".
# ----------------------------------------------------------------------------
def _conv_bn_lrelu_kernel(x_ref, w_ref, b_ref, o_ref, *, slope):
    y = jnp.dot(w_ref[...], x_ref[0], preferred_element_type=jnp.float32)
    y = y + b_ref[...]                         # (K, 1) column broadcast over lanes
    o_ref[0] = jnp.maximum(y, slope * y).astype(o_ref.dtype)


def _pick_np_tile(np_total, target):
    """Largest lane tile that divides Np, is a multiple of 128, and <= target."""
    if np_total <= target or np_total % 128 != 0:
        return np_total                        # full dim is always a legal block
    t = (min(target, np_total) // 128) * 128
    while t >= 128:
        if np_total % t == 0:
            return t
        t -= 128
    return np_total  # TODO(synk): ragged Np with no 128-divisor -> single full block


# ----------------------------------------------------------------------------
# Wrapper
# ----------------------------------------------------------------------------
def group_conv_so2_forward(x, conv_w, conv_b, bn_gamma, bn_beta,
                           *, eps=1e-5, slope=0.1,
                           target_np_tile=8192, vmem_limit_bytes=40 << 20):
    B, C, Nr, Np = x.shape
    K = C * Nr                 # sublane axis of the compute layout (c*Nr + r)
    M = B * Np * Nr            # BN sample count per channel
    f32 = jnp.float32

    # Free reshape (merges contiguous dims C,Nr) -- no transpose, no HBM copy.
    xf = x.reshape(B, K, Np)

    # --- Block-circulant weight: folds the circular 3-tap conv over Nr and the
    # CxC channel mixing into one (K, K) matmul operand acting on columns:
    #   W[c_out*Nr + r_out, c_in*Nr + r_in] =
    #       sum_k conv_w[c_out, c_in, k] * [r_in == (r_out + k - 1) mod Nr]
    wk = conv_w.astype(f32)                                     # (C_out, C_in, 3)
    r = jnp.arange(Nr)
    ring = jnp.stack([(r[None, :] == (r[:, None] + k - 1) % Nr).astype(f32)
                      for k in range(3)])                       # [k, r_out, r_in]
    w_big = jnp.einsum('oik,kpr->opir', wk, ring).reshape(K, K)

    # --- Tiling along Np (lanes).
    tp = _pick_np_tile(Np, target_np_tile)
    J = Np // tp

    x_spec = pl.BlockSpec((1, K, tp), lambda b, j: (b, 0, j))
    w_spec = pl.BlockSpec((K, K), lambda b, j: (0, 0))
    stat_spec = pl.BlockSpec((1, K, 1), lambda b, j: (b, 0, 0))

    # --- Pass 1: per-batch partial sum / sum-of-squares of the raw conv output.
    psum, psq = pl.pallas_call(
        _conv_stats_kernel,
        grid=(B, J),
        in_specs=[x_spec, w_spec],
        out_specs=[stat_spec, stat_spec],
        out_shape=[jax.ShapeDtypeStruct((B, K, 1), f32),
                   jax.ShapeDtypeStruct((B, K, 1), f32)],
        compiler_params=pltpu.CompilerParams(
            dimension_semantics=("parallel", "arbitrary"),
            vmem_limit_bytes=vmem_limit_bytes),
    )(xf, w_big)

    # --- BN scalar math on the tiny stats (host/XLA side), bias re-added
    # analytically:  sum(y+b) = S + M*b ;  sum((y+b)^2) = S2 + 2*b*S + M*b^2.
    s_k = psum.sum(axis=0)[:, 0]                     # (K,)
    s2_k = psq.sum(axis=0)[:, 0]                     # (K,)
    s_raw = s_k.reshape(C, Nr).sum(axis=1)           # (C,)
    s2_raw = s2_k.reshape(C, Nr).sum(axis=1)         # (C,)
    b_c = conv_b.astype(f32)
    s = s_raw + M * b_c
    s2 = s2_raw + 2.0 * b_c * s_raw + M * b_c * b_c
    mean = s / M
    # NOTE: E[y^2]-mean^2 (biased, training-mode BN); clamp guards tiny negative
    # values from cancellation.  For very large M a compensated accumulation
    # would be preferable.
    var = jnp.maximum(s2 / M - mean * mean, 0.0)
    scale = bn_gamma.astype(f32) * jax.lax.rsqrt(var + eps)
    shift = scale * (b_c - mean) + bn_beta.astype(f32)

    scale_col = jnp.repeat(scale, Nr).reshape(K, 1)  # per (c, r) row scale
    b2 = jnp.repeat(shift, Nr).reshape(K, 1)
    w2 = w_big * scale_col                            # fold BN scale into weight rows

    # --- Pass 2: recompute conv (MXU is otherwise idle), apply BN + LeakyReLU.
    out_flat = pl.pallas_call(
        functools.partial(_conv_bn_lrelu_kernel, slope=slope),
        grid=(B, J),
        in_specs=[x_spec, w_spec, pl.BlockSpec((K, 1), lambda b, j: (0, 0))],
        out_specs=x_spec,
        out_shape=jax.ShapeDtypeStruct((B, K, Np), x.dtype),
        compiler_params=pltpu.CompilerParams(
            dimension_semantics=("parallel", "parallel"),
            vmem_limit_bytes=vmem_limit_bytes),
    )(xf, w2, b2)

    # Free reshape back to [B, C, Nr, Np].
    return out_flat.reshape(B, C, Nr, Np)


# ----------------------------------------------------------------------------
# Pure-JAX reference (mirrors the PyTorch module in training mode)
# ----------------------------------------------------------------------------
def group_conv_so2_reference(x, conv_w, conv_b, bn_gamma, bn_beta,
                             *, eps=1e-5, slope=0.1):
    B, C, Nr, Np = x.shape
    xp = jnp.transpose(x, (0, 3, 1, 2)).reshape(B * Np, C, Nr)
    conv = (jnp.einsum('nir,oi->nor', jnp.roll(xp, 1, axis=2), conv_w[:, :, 0])
            + jnp.einsum('nir,oi->nor', xp, conv_w[:, :, 1])
            + jnp.einsum('nir,oi->nor', jnp.roll(xp, -1, axis=2), conv_w[:, :, 2])
            + conv_b[None, :, None])
    mean = jnp.mean(conv, axis=(0, 2), keepdims=True)
    var = jnp.mean((conv - mean) ** 2, axis=(0, 2), keepdims=True)
    z = (conv - mean) / jnp.sqrt(var + eps) * bn_gamma[None, :, None] \
        + bn_beta[None, :, None]
    z = jnp.where(z > 0, z, slope * z)
    return jnp.transpose(z.reshape(B, Np, C, Nr), (0, 2, 3, 1))


if __name__ == "__main__":
    # n_ch = C = 8, Nr = 16  ->  K = C*Nr = 128 (one full 128-row matmul operand)
    B, C, Nr, Np = 2, 8, 16, 256
    key = jax.random.PRNGKey(0)
    kx, kw, kb, kg, kbt = jax.random.split(key, 5)

    x = jax.random.normal(kx, (B, C, Nr, Np), dtype=jnp.float32)

    # Deterministic parameter init (matches PyTorch Conv1d default bounds).
    fan_in = C * 3
    bound = 1.0 / math.sqrt(fan_in)
    conv_w = jax.random.uniform(kw, (C, C, 3), minval=-bound, maxval=bound,
                                dtype=jnp.float32)
    conv_b = jax.random.uniform(kb, (C,), minval=-bound, maxval=bound,
                                dtype=jnp.float32)
    # Non-trivial BN affine params to exercise the scale/shift folding.
    bn_gamma = jax.random.uniform(kg, (C,), minval=0.5, maxval=1.5,
                                  dtype=jnp.float32)
    bn_beta = 0.1 * jax.random.normal(kbt, (C,), dtype=jnp.float32)

    ref = group_conv_so2_reference(x, conv_w, conv_b, bn_gamma, bn_beta)

    # Default (large-tile) configuration: single Np block per batch here.
    out_big = jax.block_until_ready(
        group_conv_so2_forward(x, conv_w, conv_b, bn_gamma, bn_beta))
    # Small-tile configuration: exercises the multi-step accumulation axis.
    out_small = jax.block_until_ready(
        group_conv_so2_forward(x, conv_w, conv_b, bn_gamma, bn_beta,
                               target_np_tile=128))

    assert out_big.shape == (B, C, Nr, Np)
    for out in (out_big, out_small):
        err = float(jnp.max(jnp.abs(out - ref)))
        assert jnp.allclose(out, ref, rtol=1e-4, atol=1e-4), f"max abs err {err}"

    print("KERNEL_OK")
</pallas_src>

<mosaic_0001>
module attributes {stable_mosaic.version = 11 : i64} {
  func.func @_conv_stats_kernel(%arg0: i32, %arg1: i32, %arg2: memref<1x128x256xf32, #tpu.memory_space<vmem>>, %arg3: memref<128x128xf32, #tpu.memory_space<vmem>>, %arg4: memref<1x128x1xf32, #tpu.memory_space<vmem>>, %arg5: memref<1x128x1xf32, #tpu.memory_space<vmem>>) attributes {dimension_semantics = [#tpu.dimension_semantics<parallel>, #tpu.dimension_semantics<arbitrary>], iteration_bounds = array<i64: 2, 1>, scalar_prefetch = 0 : i64, scratch_operands = 0 : i64, tpu.core_type = #tpu.core_type<tc>, window_params = [{transform_indices = @transform_0, window_bounds = array<i64: 1, 128, 256>}, {pipeline_mode = #tpu.pipeline_mode<synchronous>, transform_indices = @transform_1, window_bounds = array<i64: 128, 128>}, {transform_indices = @transform_2, window_bounds = array<i64: 1, 128, 1>}, {transform_indices = @transform_3, window_bounds = array<i64: 1, 128, 1>}]} {
    %c0_i32 = arith.constant 0 : i32
    %0 = arith.cmpi eq, %arg1, %c0_i32 : i32
    %1 = arith.extui %0 : i1 to i32
    %c0_i32_0 = arith.constant 0 : i32
    %2 = arith.cmpi ne, %1, %c0_i32_0 : i32
    scf.if %2 {
      %cst_19 = arith.constant 0.000000e+00 : f32
      %24 = vector.broadcast %cst_19 : f32 to vector<1x128x1xf32>
      %c0_20 = arith.constant 0 : index
      %c0_21 = arith.constant 0 : index
      %c0_22 = arith.constant 0 : index
      %25 = vector.load %arg4[%c0_20, %c0_21, %c0_22] : memref<1x128x1xf32, #tpu.memory_space<vmem>>, vector<1x128x1xf32>
      tpu.vector_store %arg4[%c0_20, %c0_21, %c0_22], %24 {strides = array<i32>} : memref<1x128x1xf32, #tpu.memory_space<vmem>>, vector<1x128x1xf32>,
      %cst_23 = arith.constant 0.000000e+00 : f32
      %26 = vector.broadcast %cst_23 : f32 to vector<1x128x1xf32>
      %c0_24 = arith.constant 0 : index
      %c0_25 = arith.constant 0 : index
      %c0_26 = arith.constant 0 : index
      %27 = vector.load %arg5[%c0_24, %c0_25, %c0_26] : memref<1x128x1xf32, #tpu.memory_space<vmem>>, vector<1x128x1xf32>
      tpu.vector_store %arg5[%c0_24, %c0_25, %c0_26], %26 {strides = array<i32>} : memref<1x128x1xf32, #tpu.memory_space<vmem>>, vector<1x128x1xf32>,
    } else {
    }
    %c0 = arith.constant 0 : index
    %c0_1 = arith.constant 0 : index
    %3 = vector.load %arg3[%c0, %c0_1] : memref<128x128xf32, #tpu.memory_space<vmem>>, vector<128x128xf32>
    %c0_2 = arith.constant 0 : index
    %c0_3 = arith.constant 0 : index
    %c0_4 = arith.constant 0 : index
    %4 = vector.load %arg2[%c0_2, %c0_3, %c0_4] : memref<1x128x256xf32, #tpu.memory_space<vmem>>, vector<1x128x256xf32>
    %5 = vector.shape_cast %4 : vector<1x128x256xf32> to vector<128x256xf32>
    %cst = arith.constant dense<0.000000e+00> : vector<128x256xf32>
    %6 = tpu.matmul %3, %5, %cst {dimension_numbers = #tpu.dot_dimension_numbers<[1], [0], [0], [1], [0, 0, 1, 1], [], []>} : vector<128x128xf32>, vector<128x256xf32>, vector<128x256xf32> -> vector<128x256xf32>
    %c0_5 = arith.constant 0 : index
    %c0_6 = arith.constant 0 : index
    %c0_7 = arith.constant 0 : index
    %7 = vector.load %arg4[%c0_5, %c0_6, %c0_7] : memref<1x128x1xf32, #tpu.memory_space<vmem>>, vector<1x128x1xf32>
    %8 = vector.shape_cast %7 : vector<1x128x1xf32> to vector<128x1xf32>
    %cst_8 = arith.constant dense<0.000000e+00> : vector<128xf32>
    %9 = vector.multi_reduction <add>, %6, %cst_8 [1] : vector<128x256xf32> to vector<128xf32>
    %10 = vector.shape_cast %9 : vector<128xf32> to vector<128x1xf32>
    %11 = arith.addf %8, %10 : vector<128x1xf32>
    %c0_9 = arith.constant 0 : index
    %c0_10 = arith.constant 0 : index
    %c0_11 = arith.constant 0 : index
    %12 = vector.load %arg4[%c0_9, %c0_10, %c0_11] : memref<1x128x1xf32, #tpu.memory_space<vmem>>, vector<1x128x1xf32>
    %13 = vector.shape_cast %12 : vector<1x128x1xf32> to vector<128x1xf32>
    %14 = vector.shape_cast %11 : vector<128x1xf32> to vector<1x128x1xf32>
    tpu.vector_store %arg4[%c0_9, %c0_10, %c0_11], %14 {strides = array<i32>} : memref<1x128x1xf32, #tpu.memory_space<vmem>>, vector<1x128x1xf32>,
    %c0_12 = arith.constant 0 : index
    %c0_13 = arith.constant 0 : index
    %c0_14 = arith.constant 0 : index
    %15 = vector.load %arg5[%c0_12, %c0_13, %c0_14] : memref<1x128x1xf32, #tpu.memory_space<vmem>>, vector<1x128x1xf32>
    %16 = vector.shape_cast %15 : vector<1x128x1xf32> to vector<128x1xf32>
    %17 = arith.mulf %6, %6 : vector<128x256xf32>
    %cst_15 = arith.constant dense<0.000000e+00> : vector<128xf32>
    %18 = vector.multi_reduction <add>, %17, %cst_15 [1] : vector<128x256xf32> to vector<128xf32>
    %19 = vector.shape_cast %18 : vector<128xf32> to vector<128x1xf32>
    %20 = arith.addf %16, %19 : vector<128x1xf32>
    %c0_16 = arith.constant 0 : index
    %c0_17 = arith.constant 0 : index
    %c0_18 = arith.constant 0 : index
    %21 = vector.load %arg5[%c0_16, %c0_17, %c0_18] : memref<1x128x1xf32, #tpu.memory_space<vmem>>, vector<1x128x1xf32>
    %22 = vector.shape_cast %21 : vector<1x128x1xf32> to vector<128x1xf32>
    %23 = vector.shape_cast %20 : vector<128x1xf32> to vector<1x128x1xf32>
    tpu.vector_store %arg5[%c0_16, %c0_17, %c0_18], %23 {strides = array<i32>} : memref<1x128x1xf32, #tpu.memory_space<vmem>>, vector<1x128x1xf32>,
    return
  }
  func.func @transform_0(%arg0: i32, %arg1: i32) -> (i32, i32, i32) {
    %c0_i32 = arith.constant 0 : i32
    %c0_i32_0 = arith.constant 0 : i32
    return %arg0, %c0_i32, %arg1 : i32, i32, i32
  }
  func.func @transform_1(%arg0: i32, %arg1: i32) -> (i32, i32) {
    %c0_i32 = arith.constant 0 : i32
    %c0_i32_0 = arith.constant 0 : i32
    %c0_i32_1 = arith.constant 0 : i32
    return %c0_i32, %c0_i32_0 : i32, i32
  }
  func.func @transform_2(%arg0: i32, %arg1: i32) -> (i32, i32, i32) {
    %c0_i32 = arith.constant 0 : i32
    %c0_i32_0 = arith.constant 0 : i32
    %c0_i32_1 = arith.constant 0 : i32
    return %arg0, %c0_i32, %c0_i32_0 : i32, i32, i32
  }
  func.func @transform_3(%arg0: i32, %arg1: i32) -> (i32, i32, i32) {
    %c0_i32 = arith.constant 0 : i32
    %c0_i32_0 = arith.constant 0 : i32
    %c0_i32_1 = arith.constant 0 : i32
    return %arg0, %c0_i32, %c0_i32_0 : i32, i32, i32
  }
}

</mosaic_0001>

<llo_original>
// kernel: tpu_custom_call.1
$region0: #{tpu_custom_call.1}
  #allocation0 [shape = 'u32[]', space=smem, size = 0x4, offset = 0x4, fixed_abs, tag = 'smem constant byte address 0x4 - core index']
  #allocation1 [shape = 'u32[144,128]{1,0:T(1,128)}', space=vmem, size = 0x12000, scoped, tag = 'internal scratch']
  %s0 = inlined_call_operand.hbm [shape: f32[2,128,256], index: 0, kind: input, shape index: {}]
  %s1 = inlined_call_operand.hbm [shape: f32[128,128], index: 1, kind: input, shape index: {}]
  %s2 = inlined_call_operand.vmem [shape: f32[2,128,1], index: 2, kind: output, shape index: {0}]
  %s3 = inlined_call_operand.vmem [shape: f32[2,128,1], index: 3, kind: output, shape index: {1}]
  %4 = xla_tuple %s2, %s3
  %s5 = sld [smem:[#allocation0]]
  $region61: #{tpu_custom_call.1} parent=0
    _
  %s7 = ssub.s32 1, %s5
  %s8 = scalar_select 0, %s7, %s5
  $region1: #{tpu_custom_call.1} parent=0
    #allocation2 [shape = 'u8[262144]{0}', space=vmem, size = 0x40000, scoped, tag = 'input window, operand 0']
    #allocation3 [shape = 's32[2]{0}', space=sflag, size = 0x8, scoped, tag = 'scoped memory for tpu_custom_call.1']
    #allocation4 [shape = 'u8[65536]{0}', space=vmem, size = 0x10000, scoped, tag = 'input window, operand 1, single buffered']
    #allocation5 [shape = 's32[1]{0}', space=sflag, size = 0x4, scoped, tag = 'scoped memory for tpu_custom_call.1']
    %9 = vsyncpa [#allocation3], 0
    %s10 = scalar_lea.sflag [#allocation3], 1
    %11 = vsyncpa %s10, 0
    %12 = vsyncpa [#allocation5], 0
    loop: start=0, step=1, limit=4
    $region2: #{tpu_custom_call.1} parent=1 // loop_pre_header
      _
    $region3: #{tpu_custom_call.1} parent=1 // loop_header
      %s14 = sphi 0, %s18
      %p15 = scmp.ge.s32.totalorder %s14, 4
      %s21 = sphi 0, %s33
      %s22 = sphi 0, %s29
      %s23 = sphi 0, %s21
      %s24 = sphi 0, %s22
      %s25 = sphi 0, %s23
      %s26 = sphi 0, %s24
      %s38 = sphi 0, %s40
      %s41 = sphi 0, %s38
      %s42 = sphi 0, %s41
      %s58 = sphi 0, %s42
      %s62 = sphi 0, %s62
      %s64 = sphi 0, %s62
      %s65 = sphi 0, %s64
      %s79 = sphi 0, %s65
      %s85 = sphi 0, %s87
      %s88 = sphi 0, %s85
      %s89 = sphi 0, %s88
      %s105 = sphi 0, %s89
      %s111 = sphi 0, %s113
      %s114 = sphi 0, %s111
      %s115 = sphi 0, %s114
      %s131 = sphi 0, %s115
    $region4: #{tpu_custom_call.1} parent=1 // loop_header_branch
      %17 = sbr.rel (%p15) target = $region8
    $region5: #{tpu_custom_call.1} parent=1 // loop_body
      %s19 = ssub.s32 %s14, 1
      %s20 = ssub.s32 %s14, 2
      %s27 = sadd.s32 1, %s22
      %p28 = scmp.ge.s32.totalorder %s27, 1
      %s29 = scalar_select %p28, 0, %s27
      %s30 = sadd.s32 1, %s21
      %s31 = scalar_select %p28, %s30, %s21
      %p32 = scmp.ge.s32.totalorder %s31, 2
      %s33 = scalar_select %p32, 0, %s31
      %s34 = ssub.s32 %s21, %s33
      %s35 = ssub.s32 %s22, %s29
      %s36 = sor.u32 %s34, %s35
      %p37 = scmp.eq.s32.totalorder %s36, 0
      %s39 = sadd.s32 %s38, 1
      %s40 = scalar_select %p37, %s38, %s39
      %p43 = pneg %p37
      %p44 = scmp.eq.s32.totalorder %s14, 1
      %p45 = por %p43, %p44
      %p46 = scmp.ne.s32.totalorder %s38, %s41
      %p47 = scmp.eq.s32.totalorder %s14, 0
      %p48 = por %p46, %p47
      %p49 = scmp.ne.s32.totalorder %s38, %s41
      %p50 = scmp.eq.s32.totalorder %s19, 1
      %p51 = por %p49, %p50
      %p52 = scmp.ne.s32.totalorder %s41, %s42
      %p53 = scmp.eq.s32.totalorder %s19, 0
      %p54 = por %p52, %p53
      %p55 = scmp.ne.s32.totalorder %s41, %s42
      %p56 = scmp.eq.s32.totalorder %s20, 1
      %p57 = por %p55, %p56
      %p59 = scmp.ne.s32.totalorder %s42, %s58
      %p60 = scmp.eq.s32.totalorder %s20, 0
      %p61 = por %p59, %p60
      %s63 = sadd.s32 %s62, 1
      %p66 = scmp.eq.s32.totalorder %s14, 1
      %p67 = scmp.ne.s32.totalorder %s62, %s64
      %p68 = scmp.eq.s32.totalorder %s14, 0
      %p69 = por %p67, %p68
      %p70 = scmp.ne.s32.totalorder %s62, %s64
      %p71 = scmp.eq.s32.totalorder %s19, 1
      %p72 = por %p70, %p71
      %p73 = scmp.ne.s32.totalorder %s64, %s65
      %p74 = scmp.eq.s32.totalorder %s19, 0
      %p75 = por %p73, %p74
      %p76 = scmp.ne.s32.totalorder %s64, %s65
      %p77 = scmp.eq.s32.totalorder %s20, 1
      %p78 = por %p76, %p77
      %p80 = scmp.ne.s32.totalorder %s65, %s79
      %p81 = scmp.eq.s32.totalorder %s20, 0
      %p82 = por %p80, %p81
      %s83 = ssub.s32 %s21, %s33
      %p84 = scmp.eq.s32.totalorder %s83, 0
      %s86 = sadd.s32 %s85, 1
      %s87 = scalar_select %p84, %s85, %s86
      %p90 = pneg %p84
      %p91 = scmp.eq.s32.totalorder %s14, 1
      %p92 = por %p90, %p91
      %p93 = scmp.ne.s32.totalorder %s85, %s88
      %p94 = scmp.eq.s32.totalorder %s14, 0
      %p95 = por %p93, %p94
      %p96 = scmp.ne.s32.totalorder %s85, %s88
      %p97 = scmp.eq.s32.totalorder %s19, 1
      %p98 = por %p96, %p97
      %p99 = scmp.ne.s32.totalorder %s88, %s89
      %p100 = scmp.eq.s32.totalorder %s19, 0
      %p101 = por %p99, %p100
      %p102 = scmp.ne.s32.totalorder %s88, %s89
      %p103 = scmp.eq.s32.totalorder %s20, 1
      %p104 = por %p102, %p103
      %p106 = scmp.ne.s32.totalorder %s89, %s105
      %p107 = scmp.eq.s32.totalorder %s20, 0
      %p108 = por %p106, %p107
      %s109 = ssub.s32 %s21, %s33
      %p110 = scmp.eq.s32.totalorder %s109, 0
      %s112 = sadd.s32 %s111, 1
      %s113 = scalar_select %p110, %s111, %s112
      %p116 = pneg %p110
      %p117 = scmp.eq.s32.totalorder %s14, 1
      %p118 = por %p116, %p117
      %p119 = scmp.ne.s32.totalorder %s111, %s114
      %p120 = scmp.eq.s32.totalorder %s14, 0
      %p121 = por %p119, %p120
      %p122 = scmp.ne.s32.totalorder %s111, %s114
      %p123 = scmp.eq.s32.totalorder %s19, 1
      %p124 = por %p122, %p123
      %p125 = scmp.ne.s32.totalorder %s114, %s115
      %p126 = scmp.eq.s32.totalorder %s19, 0
      %p127 = por %p125, %p126
      %p128 = scmp.ne.s32.totalorder %s114, %s115
      %p129 = scmp.eq.s32.totalorder %s20, 1
      %p130 = por %p128, %p129
      %p132 = scmp.ne.s32.totalorder %s115, %s131
      %p133 = scmp.eq.s32.totalorder %s20, 0
      %p134 = por %p132, %p133
      %p135 = scmp.le.s32.totalorder 1, %s14
      %p136 = scmp.lt.s32.totalorder %s14, 3
      %p137 = pnand %p135, %p136
      %p138 = pneg %p137
      // Predicated region
      $region9: #{tpu_custom_call.1} parent=5 // pred_check
        _
      $region10: #{tpu_custom_call.1} parent=5 // pred_check_branch
        %140 = sbr.rel (%p137) target = $region12
      $region11: #{tpu_custom_call.1} parent=5 // pred_region
        %s141 = ssub.s32 %s14, 1
        // Predicated region
        $region13: #{tpu_custom_call.1} parent=11 // pred_check
          %p142 = pneg %p75
        $region14: #{tpu_custom_call.1} parent=11 // pred_check_branch
          %144 = sbr.rel (%p142) target = $region16
        $region15: #{tpu_custom_call.1} parent=11 // pred_region
          %s146 = ssub.s32 2048, 2048
          %147 = vsyncadd [#allocation5], %s146
          %s148 = sshll.u32 [#allocation4], 4
          %s149 = int_to_ptr.vmem [resolvable:$true] %s148
          %154 = dma.hbm_to_vmem [thread:$0]  %s1, 2048, %s149, [#allocation5], 128, 128, 8
        $region16: #{tpu_custom_call.1} parent=11 // pred_fallthru
          _
      $region12: #{tpu_custom_call.1} parent=5 // pred_fallthru
        _
      %p155 = scmp.lt.s32.totalorder %s14, 2
      // Predicated region
      $region17: #{tpu_custom_call.1} parent=5 // pred_check
        %p156 = pneg %p155
      $region18: #{tpu_custom_call.1} parent=5 // pred_check_branch
        %158 = sbr.rel (%p156) target = $region20
      $region19: #{tpu_custom_call.1} parent=5 // pred_region
        // Predicated region
        $region21: #{tpu_custom_call.1} parent=19 // pred_check
          %p159 = pneg %p48
        $region22: #{tpu_custom_call.1} parent=19 // pred_check_branch
          %161 = sbr.rel (%p159) target = $region24
        $region23: #{tpu_custom_call.1} parent=19 // pred_region
          %s162 = sand.u32 %s38, 1
          %s163 = scalar_lea.sflag [#allocation3], %s162
          %s164 = sand.u32 %s38, 1
          %s165 = smul.addr %s164, 256
          %s166 = scalar_lea.vmem [#allocation2], %s165
          %s167 = smul.u32 2, %s22
          %s169 = ssub.s32 4096, 4096
          %170 = vsyncadd %s163, %s169
          %s171 = smul.addr %s21, 32
          %s172 = sadd.s32 %s167, %s171
          %s173 = smul.addr %s172, 128
          %s174 = scalar_lea.hbm %s0, %s173
          %s175 = sshll.u32 %s166, 4
          %s176 = int_to_ptr.vmem [resolvable:$true] %s175
          %181 = dma.hbm_to_vmem [thread:$0]  %s174, 4096, %s176, %s163, 256, 256, 16
        $region24: #{tpu_custom_call.1} parent=19 // pred_fallthru
          _
      $region20: #{tpu_custom_call.1} parent=5 // pred_fallthru
        _
      %p182 = scmp.le.s32.totalorder 1, %s14
      %p183 = scmp.lt.s32.totalorder %s14, 3
      %p184 = pnand %p182, %p183
      %p185 = pneg %p184
      // Predicated region
      $region25: #{tpu_custom_call.1} parent=5 // pred_check
        _
      $region26: #{tpu_custom_call.1} parent=5 // pred_check_branch
        %187 = sbr.rel (%p184) target = $region28
      $region27: #{tpu_custom_call.1} parent=5 // pred_region
        %s188 = ssub.s32 %s14, 1
        %s189 = sand.u32 %s41, 1
        %s190 = scalar_lea.sflag [#allocation3], %s189
        %s191 = sand.u32 %s41, 1
        %s192 = smul.addr %s191, 256
        %s193 = scalar_lea.vmem [#allocation2], %s192
        // Predicated region
        $region29: #{tpu_custom_call.1} parent=27 // pred_check
          %p194 = pneg %p54
        $region30: #{tpu_custom_call.1} parent=27 // pred_check_branch
          %196 = sbr.rel (%p194) target = $region32
        $region31: #{tpu_custom_call.1} parent=27 // pred_region
          %197 = dma.done %s190, 4096
        $region32: #{tpu_custom_call.1} parent=27 // pred_fallthru
          _
        // Predicated region
        $region33: #{tpu_custom_call.1} parent=27 // pred_check
          %p198 = pneg %p75
        $region34: #{tpu_custom_call.1} parent=27 // pred_check_branch
          %200 = sbr.rel (%p198) target = $region36
        $region35: #{tpu_custom_call.1} parent=27 // pred_region
          %201 = dma.done [#allocation5], 2048
        $region36: #{tpu_custom_call.1} parent=27 // pred_fallthru
          _
        %s202 = sand.u32 %s41, 1
        %s203 = scalar_lea.sflag [#allocation3], %s202
        %s204 = sand.u32 %s41, 1
        %s205 = smul.addr %s204, 256
        %s206 = scalar_lea.vmem [#allocation2], %s205
        %p207 = pneg %p54
        %p208 = pneg %p51
        %p209 = pneg %p75
        %p210 = pneg %p72
        %p211 = pneg %p101
        %p212 = pneg %p98
        %p213 = scmp.lt.s32.totalorder %s23, 1
        %s214 = scalar_select %p213, %s23, 1
        %s215 = smul.addr %s214, 16
        %s216 = smul.addr %s215, 8
        %s217 = scalar_lea.vmem %s2, %s216
        %p218 = pneg %p127
        %p219 = pneg %p124
        %p220 = scmp.lt.s32.totalorder %s23, 1
        %s221 = scalar_select %p220, %s23, 1
        %s222 = smul.addr %s221, 16
        %s223 = smul.addr %s222, 8
        %s224 = scalar_lea.vmem %s3, %s223
        %s225 = smul.u32 2, %s24
        %p226 = scmp.lt.s32.totalorder %s23, 1
        %s227 = scalar_select %p226, %s23, 1
        %s228 = smul.addr %s227, 16
        %s229 = smul.addr %s228, 8
        %s230 = scalar_lea.vmem %s2, %s229
        %p231 = scmp.lt.s32.totalorder %s23, 1
        %s232 = scalar_select %p231, %s23, 1
        %s233 = smul.addr %s232, 16
        %s234 = smul.addr %s233, 8
        %s235 = scalar_lea.vmem %s3, %s234
        %p236 = scmp.eq.s32.totalorder %s24, 0
        // Predicated region
        $region37: #{tpu_custom_call.1} parent=27 // pred_check
          %p237 = pneg %p236
        $region38: #{tpu_custom_call.1} parent=27 // pred_check_branch
          %239 = sbr.rel (%p237) target = $region40
        $region39: #{tpu_custom_call.1} parent=27 // pred_region
          %vm240 = vcmask 7168
          %241 = vst.msk [vmem:[%s230] sm:$0xff] %vm240, 0.0
          %242 = vst.msk [vmem:[%s230 + $0x8] sm:$0xff] %vm240, 0.0
          %243 = vst.msk [vmem:[%s230 + $0x10] sm:$0xff] %vm240, 0.0
          %244 = vst.msk [vmem:[%s230 + $0x18] sm:$0xff] %vm240, 0.0
          %245 = vst.msk [vmem:[%s230 + $0x20] sm:$0xff] %vm240, 0.0
          %246 = vst.msk [vmem:[%s230 + $0x28] sm:$0xff] %vm240, 0.0
          %247 = vst.msk [vmem:[%s230 + $0x30] sm:$0xff] %vm240, 0.0
          %248 = vst.msk [vmem:[%s230 + $0x38] sm:$0xff] %vm240, 0.0
          %249 = vst.msk [vmem:[%s230 + $0x40] sm:$0xff] %vm240, 0.0
          %250 = vst.msk [vmem:[%s230 + $0x48] sm:$0xff] %vm240, 0.0
          %251 = vst.msk [vmem:[%s230 + $0x50] sm:$0xff] %vm240, 0.0
          %252 = vst.msk [vmem:[%s230 + $0x58] sm:$0xff] %vm240, 0.0
          %253 = vst.msk [vmem:[%s230 + $0x60] sm:$0xff] %vm240, 0.0
          %254 = vst.msk [vmem:[%s230 + $0x68] sm:$0xff] %vm240, 0.0
          %255 = vst.msk [vmem:[%s230 + $0x70] sm:$0xff] %vm240, 0.0
          %256 = vst.msk [vmem:[%s230 + $0x78] sm:$0xff] %vm240, 0.0
          %257 = vst.msk [vmem:[%s235] sm:$0xff] %vm240, 0.0
          %258 = vst.msk [vmem:[%s235 + $0x8] sm:$0xff] %vm240, 0.0
          %259 = vst.msk [vmem:[%s235 + $0x10] sm:$0xff] %vm240, 0.0
          %260 = vst.msk [vmem:[%s235 + $0x18] sm:$0xff] %vm240, 0.0
          %261 = vst.msk [vmem:[%s235 + $0x20] sm:$0xff] %vm240, 0.0
          %262 = vst.msk [vmem:[%s235 + $0x28] sm:$0xff] %vm240, 0.0
          %263 = vst.msk [vmem:[%s235 + $0x30] sm:$0xff] %vm240, 0.0
          %264 = vst.msk [vmem:[%s235 + $0x38] sm:$0xff] %vm240, 0.0
          %265 = vst.msk [vmem:[%s235 + $0x40] sm:$0xff] %vm240, 0.0
          %266 = vst.msk [vmem:[%s235 + $0x48] sm:$0xff] %vm240, 0.0
          %267 = vst.msk [vmem:[%s235 + $0x50] sm:$0xff] %vm240, 0.0
          %268 = vst.msk [vmem:[%s235 + $0x58] sm:$0xff] %vm240, 0.0
          %269 = vst.msk [vmem:[%s235 + $0x60] sm:$0xff] %vm240, 0.0
          %270 = vst.msk [vmem:[%s235 + $0x68] sm:$0xff] %vm240, 0.0
          %271 = vst.msk [vmem:[%s235 + $0x70] sm:$0xff] %vm240, 0.0
          %272 = vst.msk [vmem:[%s235 + $0x78] sm:$0xff] %vm240, 0.0
        $region40: #{tpu_custom_call.1} parent=27 // pred_fallthru
          _
        %v273 = vld [vmem:[#allocation4] sm:$0xff]
        %v274 = vld [vmem:[#allocation4 + $0x8] sm:$0xff]
        %v275 = vld [vmem:[#allocation4 + $0x10] sm:$0xff]
        %v276 = vld [vmem:[#allocation4 + $0x18] sm:$0xff]
        %v277 = vld [vmem:[#allocation4 + $0x20] sm:$0xff]
        %v278 = vld [vmem:[#allocation4 + $0x28] sm:$0xff]
        %v279 = vld [vmem:[#allocation4 + $0x30] sm:$0xff]
        %v280 = vld [vmem:[#allocation4 + $0x38] sm:$0xff]
        %v281 = vld [vmem:[#allocation4 + $0x40] sm:$0xff]
        %v282 = vld [vmem:[#allocation4 + $0x48] sm:$0xff]
        %v283 = vld [vmem:[#allocation4 + $0x50] sm:$0xff]
        %v284 = vld [vmem:[#allocation4 + $0x58] sm:$0xff]
        %v285 = vld [vmem:[#allocation4 + $0x60] sm:$0xff]
        %v286 = vld [vmem:[#allocation4 + $0x68] sm:$0xff]
        %v287 = vld [vmem:[#allocation4 + $0x70] sm:$0xff]
        %v288 = vld [vmem:[#allocation4 + $0x78] sm:$0xff]
        %v289 = vld [vmem:[%s193] sm:$0xff]
        %v290 = vld [vmem:[%s193 + $0x8] sm:$0xff]
        %v291 = vld [vmem:[%s193 + $0x10] sm:$0xff]
        %v292 = vld [vmem:[%s193 + $0x18] sm:$0xff]
        %v293 = vld [vmem:[%s193 + $0x20] sm:$0xff]
        %v294 = vld [vmem:[%s193 + $0x28] sm:$0xff]
        %v295 = vld [vmem:[%s193 + $0x30] sm:$0xff]
        %v296 = vld [vmem:[%s193 + $0x38] sm:$0xff]
        %v297 = vld [vmem:[%s193 + $0x40] sm:$0xff]
        %v298 = vld [vmem:[%s193 + $0x48] sm:$0xff]
        %v299 = vld [vmem:[%s193 + $0x50] sm:$0xff]
        %v300 = vld [vmem:[%s193 + $0x58] sm:$0xff]
        %v301 = vld [vmem:[%s193 + $0x60] sm:$0xff]
        %v302 = vld [vmem:[%s193 + $0x68] sm:$0xff]
        %v303 = vld [vmem:[%s193 + $0x70] sm:$0xff]
        %v304 = vld [vmem:[%s193 + $0x78] sm:$0xff]
        %v305 = vld [vmem:[%s193 + $0x80] sm:$0xff]
        %v306 = vld [vmem:[%s193 + $0x88] sm:$0xff]
        %v307 = vld [vmem:[%s193 + $0x90] sm:$0xff]
        %v308 = vld [vmem:[%s193 + $0x98] sm:$0xff]
        %v309 = vld [vmem:[%s193 + $0xa0] sm:$0xff]
        %v310 = vld [vmem:[%s193 + $0xa8] sm:$0xff]
        %v311 = vld [vmem:[%s193 + $0xb0] sm:$0xff]
        %v312 = vld [vmem:[%s193 + $0xb8] sm:$0xff]
        %v313 = vld [vmem:[%s193 + $0xc0] sm:$0xff]
        %v314 = vld [vmem:[%s193 + $0xc8] sm:$0xff]
        %v315 = vld [vmem:[%s193 + $0xd0] sm:$0xff]
        %v316 = vld [vmem:[%s193 + $0xd8] sm:$0xff]
        %v317 = vld [vmem:[%s193 + $0xe0] sm:$0xff]
        %v318 = vld [vmem:[%s193 + $0xe8] sm:$0xff]
        %v319 = vld [vmem:[%s193 + $0xf0] sm:$0xff]
        %v320 = vld [vmem:[%s193 + $0xf8] sm:$0xff]
        %321 = vmatprep.subr.mxu0 %v290
        %322 = vmatpush1.msra.mxu0 %v289
        %323 = vmatprep.subr.mxu0 %v292
        %324 = vmatpush1.msra.mxu0 %v291
        %325 = vmatprep.subr.mxu0 %v294
        %326 = vmatpush1.msra.mxu0 %v293
        %327 = vmatprep.subr.mxu0 %v296
        %328 = vmatpush1.msra.mxu0 %v295
        %329 = vmatprep.subr.mxu0 %v298
        %330 = vmatpush1.msra.mxu0 %v297
        %331 = vmatprep.subr.mxu0 %v300
        %332 = vmatpush1.msra.mxu0 %v299
        %333 = vmatprep.subr.mxu0 %v302
        %334 = vmatpush1.msra.mxu0 %v301
        %335 = vmatprep.subr.mxu0 %v304
        %336 = vmatpush1.msra.mxu0 %v303
        %337 = vmatprep.subr.mxu0 %v306
        %338 = vmatpush1.msra.mxu0 %v305
        %339 = vmatprep.subr.mxu0 %v308
        %340 = vmatpush1.msra.mxu0 %v307
        %341 = vmatprep.subr.mxu0 %v310
        %342 = vmatpush1.msra.mxu0 %v309
        %343 = vmatprep.subr.mxu0 %v312
        %344 = vmatpush1.msra.mxu0 %v311
        %345 = vmatprep.subr.mxu0 %v314
        %346 = vmatpush1.msra.mxu0 %v313
        %347 = vmatprep.subr.mxu0 %v316
        %348 = vmatpush1.msra.mxu0 %v315
        %349 = vmatprep.subr.mxu0 %v318
        %350 = vmatpush1.msra.mxu0 %v317
        %351 = vmatprep.subr.mxu0 %v320
        %352 = vmatpush1.msra.mxu0 %v319
        %353 = vmatprep.subr.mxu0 0.0
        %354 = vmatpush1.msra.mxu0 0.0
        %355 = vmatprep.subr.mxu0 0.0
        %356 = vmatpush1.msra.mxu0 0.0
        %357 = vmatprep.subr.mxu0 0.0
        %358 = vmatpush1.msra.mxu0 0.0
        %359 = vmatprep.subr.mxu0 0.0
        %360 = vmatpush1.msra.mxu0 0.0
        %361 = vmatprep.subr.mxu0 0.0
        %362 = vmatpush1.msra.mxu0 0.0
        %363 = vmatprep.subr.mxu0 0.0
        %364 = vmatpush1.msra.mxu0 0.0
        %365 = vmatprep.subr.mxu0 0.0
        %366 = vmatpush1.msra.mxu0 0.0
        %367 = vmatprep.subr.mxu0 0.0
        %368 = vmatpush1.msra.mxu0 0.0
        %369 = vmatprep.subr.mxu0 0.0
        %370 = vmatpush1.msra.mxu0 0.0
        %371 = vmatprep.subr.mxu0 0.0
        %372 = vmatpush1.msra.mxu0 0.0
        %373 = vmatprep.subr.mxu0 0.0
        %374 = vmatpush1.msra.mxu0 0.0
        %375 = vmatprep.subr.mxu0 0.0
        %376 = vmatpush1.msra.mxu0 0.0
        %377 = vmatprep.subr.mxu0 0.0
        %378 = vmatpush1.msra.mxu0 0.0
        %379 = vmatprep.subr.mxu0 0.0
        %380 = vmatpush1.msra.mxu0 0.0
        %381 = vmatprep.subr.mxu0 0.0
        %382 = vmatpush1.msra.mxu0 0.0
        %383 = vmatprep.subr.mxu0 0.0
        %384 = vmatpush1.msra.mxu0 0.0
        %385 = vmatprep.mubr.f32.mxu0 0.0
        %386 = vmatmul.mubr.f32.gmra.mrb[0].mxu0 %v273
        %v387 = vpop.f32.mrb[0].mxu0
        %v388 = vadd.f32 0.0, %v387
        %v389 = vpop.f32.mrb[0].mxu0
        %v390 = vadd.f32 0.0, %v389
        %391 = vmatprep.mubr.f32.mxu0 0.0
        %392 = vmatmul.mubr.f32.gmra.mrb[0].mxu0 %v274
        %v393 = vpop.f32.mrb[0].mxu0
        %v394 = vadd.f32 0.0, %v393
        %v395 = vpop.f32.mrb[0].mxu0
        %v396 = vadd.f32 0.0, %v395
        %397 = vmatprep.mubr.f32.mxu0 0.0
        %398 = vmatmul.mubr.f32.gmra.mrb[0].mxu0 %v275
        %v399 = vpop.f32.mrb[0].mxu0
        %v400 = vadd.f32 0.0, %v399
        %v401 = vpop.f32.mrb[0].mxu0
        %v402 = vadd.f32 0.0, %v401
        %403 = vmatprep.mubr.f32.mxu0 0.0
        %404 = vmatmul.mubr.f32.gmra.mrb[0].mxu0 %v276
        %v405 = vpop.f32.mrb[0].mxu0
        %v406 = vadd.f32 0.0, %v405
        %v407 = vpop.f32.mrb[0].mxu0
        %v408 = vadd.f32 0.0, %v407
        %409 = vmatprep.mubr.f32.mxu0 0.0
        %410 = vmatmul.mubr.f32.gmra.mrb[0].mxu0 %v277
        %v411 = vpop.f32.mrb[0].mxu0
        %v412 = vadd.f32 0.0, %v411
        %v413 = vpop.f32.mrb[0].mxu0
        %v414 = vadd.f32 0.0, %v413
        %415 = vmatprep.mubr.f32.mxu0 0.0
        %416 = vmatmul.mubr.f32.gmra.mrb[0].mxu0 %v278
        %v417 = vpop.f32.mrb[0].mxu0
        %v418 = vadd.f32 0.0, %v417
        %v419 = vpop.f32.mrb[0].mxu0
        %v420 = vadd.f32 0.0, %v419
        %421 = vmatprep.mubr.f32.mxu0 0.0
        %422 = vmatmul.mubr.f32.gmra.mrb[0].mxu0 %v279
        %v423 = vpop.f32.mrb[0].mxu0
        %v424 = vadd.f32 0.0, %v423
        %v425 = vpop.f32.mrb[0].mxu0
        %v426 = vadd.f32 0.0, %v425
        %427 = vmatprep.mubr.f32.mxu0 0.0
        %428 = vmatmul.mubr.f32.gmra.mrb[0].mxu0 %v280
        %v429 = vpop.f32.mrb[0].mxu0
        %v430 = vadd.f32 0.0, %v429
        %v431 = vpop.f32.mrb[0].mxu0
        %v432 = vadd.f32 0.0, %v431
        %433 = vmatprep.mubr.f32.mxu0 0.0
        %434 = vmatmul.mubr.f32.gmra.mrb[0].mxu0 %v281
        %v435 = vpop.f32.mrb[0].mxu0
        %v436 = vadd.f32 0.0, %v435
        %v437 = vpop.f32.mrb[0].mxu0
        %v438 = vadd.f32 0.0, %v437
        %439 = vmatprep.mubr.f32.mxu0 0.0
        %440 = vmatmul.mubr.f32.gmra.mrb[0].mxu0 %v282
        %v441 = vpop.f32.mrb[0].mxu0
        %v442 = vadd.f32 0.0, %v441
        %v443 = vpop.f32.mrb[0].mxu0
        %v444 = vadd.f32 0.0, %v443
        %445 = vmatprep.mubr.f32.mxu0 0.0
        %446 = vmatmul.mubr.f32.gmra.mrb[0].mxu0 %v283
        %v447 = vpop.f32.mrb[0].mxu0
        %v448 = vadd.f32 0.0, %v447
        %v449 = vpop.f32.mrb[0].mxu0
        %v450 = vadd.f32 0.0, %v449
        %451 = vmatprep.mubr.f32.mxu0 0.0
        %452 = vmatmul.mubr.f32.gmra.mrb[0].mxu0 %v284
        %v453 = vpop.f32.mrb[0].mxu0
        %v454 = vadd.f32 0.0, %v453
        %v455 = vpop.f32.mrb[0].mxu0
        %v456 = vadd.f32 0.0, %v455
        %457 = vmatprep.mubr.f32.mxu0 0.0
        %458 = vmatmul.mubr.f32.gmra.mrb[0].mxu0 %v285
        %v459 = vpop.f32.mrb[0].mxu0
        %v460 = vadd.f32 0.0, %v459
        %v461 = vpop.f32.mrb[0].mxu0
        %v462 = vadd.f32 0.0, %v461
        %463 = vmatprep.mubr.f32.mxu0 0.0
        %464 = vmatmul.mubr.f32.gmra.mrb[0].mxu0 %v286
        %v465 = vpop.f32.mrb[0].mxu0
        %v466 = vadd.f32 0.0, %v465
        %v467 = vpop.f32.mrb[0].mxu0
        %v468 = vadd.f32 0.0, %v467
        %469 = vmatprep.mubr.f32.mxu0 0.0
        %470 = vmatmul.mubr.f32.gmra.mrb[0].mxu0 %v287
        %v471 = vpop.f32.mrb[0].mxu0
        %v472 = vadd.f32 0.0, %v471
        %v473 = vpop.f32.mrb[0].mxu0
        %v474 = vadd.f32 0.0, %v473
        %475 = vmatprep.mubr.f32.mxu0 0.0
        %476 = vmatmul.mubr.f32.gmra.mrb[0].mxu0 %v288
        %v477 = vpop.f32.mrb[0].mxu0
        %v478 = vadd.f32 0.0, %v477
        %v479 = vpop.f32.mrb[0].mxu0
        %v480 = vadd.f32 0.0, %v479
        %481 = vdwg.mxu0
        %v482 = vld [vmem:[%s230] sm:$0xff]
        %v483 = vld [vmem:[%s230 + $0x8] sm:$0xff]
        %v484 = vld [vmem:[%s230 + $0x10] sm:$0xff]
        %v485 = vld [vmem:[%s230 + $0x18] sm:$0xff]
        %v486 = vld [vmem:[%s230 + $0x20] sm:$0xff]
        %v487 = vld [vmem:[%s230 + $0x28] sm:$0xff]
        %v488 = vld [vmem:[%s230 + $0x30] sm:$0xff]
        %v489 = vld [vmem:[%s230 + $0x38] sm:$0xff]
        %v490 = vld [vmem:[%s230 + $0x40] sm:$0xff]
        %v491 = vld [vmem:[%s230 + $0x48] sm:$0xff]
        %v492 = vld [vmem:[%s230 + $0x50] sm:$0xff]
        %v493 = vld [vmem:[%s230 + $0x58] sm:$0xff]
        %v494 = vld [vmem:[%s230 + $0x60] sm:$0xff]
        %v495 = vld [vmem:[%s230 + $0x68] sm:$0xff]
        %v496 = vld [vmem:[%s230 + $0x70] sm:$0xff]
        %v497 = vld [vmem:[%s230 + $0x78] sm:$0xff]
        %v498 = vadd.f32 %v388, %v390
        %499 = vadd.xlane.f32.xlu0 %v498
        %v500 = vpop.xlane.xlu0 %499
        %v501 = vadd.f32 %v394, %v396
        %502 = vadd.xlane.f32.xlu0 %v501
        %v503 = vpop.xlane.xlu0 %502
        %v504 = vadd.f32 %v400, %v402
        %505 = vadd.xlane.f32.xlu0 %v504
        %v506 = vpop.xlane.xlu0 %505
        %v507 = vadd.f32 %v406, %v408
        %508 = vadd.xlane.f32.xlu0 %v507
        %v509 = vpop.xlane.xlu0 %508
        %v510 = vadd.f32 %v412, %v414
        %511 = vadd.xlane.f32.xlu0 %v510
        %v512 = vpop.xlane.xlu0 %511
        %v513 = vadd.f32 %v418, %v420
        %514 = vadd.xlane.f32.xlu0 %v513
        %v515 = vpop.xlane.xlu0 %514
        %v516 = vadd.f32 %v424, %v426
        %517 = vadd.xlane.f32.xlu0 %v516
        %v518 = vpop.xlane.xlu0 %517
        %v519 = vadd.f32 %v430, %v432
        %520 = vadd.xlane.f32.xlu0 %v519
        %v521 = vpop.xlane.xlu0 %520
        %v522 = vadd.f32 %v436, %v438
        %523 = vadd.xlane.f32.xlu0 %v522
        %v524 = vpop.xlane.xlu0 %523
        %v525 = vadd.f32 %v442, %v444
        %526 = vadd.xlane.f32.xlu0 %v525
        %v527 = vpop.xlane.xlu0 %526
        %v528 = vadd.f32 %v448, %v450
        %529 = vadd.xlane.f32.xlu0 %v528
        %v530 = vpop.xlane.xlu0 %529
        %v531 = vadd.f32 %v454, %v456
        %532 = vadd.xlane.f32.xlu0 %v531
        %v533 = vpop.xlane.xlu0 %532
        %v534 = vadd.f32 %v460, %v462
        %535 = vadd.xlane.f32.xlu0 %v534
        %v536 = vpop.xlane.xlu0 %535
        %v537 = vadd.f32 %v466, %v468
        %538 = vadd.xlane.f32.xlu0 %v537
        %v539 = vpop.xlane.xlu0 %538
        %v540 = vadd.f32 %v472, %v474
        %541 = vadd.xlane.f32.xlu0 %v540
        %v542 = vpop.xlane.xlu0 %541
        %v543 = vadd.f32 %v478, %v480
        %544 = vadd.xlane.f32.xlu0 %v543
        %v545 = vpop.xlane.xlu0 %544
        %v546 = vadd.f32 %v482, %v500
        %v547 = vadd.f32 %v483, %v503
        %v548 = vadd.f32 %v484, %v506
        %v549 = vadd.f32 %v485, %v509
        %v550 = vadd.f32 %v486, %v512
        %v551 = vadd.f32 %v487, %v515
        %v552 = vadd.f32 %v488, %v518
        %v553 = vadd.f32 %v489, %v521
        %v554 = vadd.f32 %v490, %v524
        %v555 = vadd.f32 %v491, %v527
        %v556 = vadd.f32 %v492, %v530
        %v557 = vadd.f32 %v493, %v533
        %v558 = vadd.f32 %v494, %v536
        %v559 = vadd.f32 %v495, %v539
        %v560 = vadd.f32 %v496, %v542
        %v561 = vadd.f32 %v497, %v545
        %vm562 = vcmask 7168
        %563 = vst.msk [vmem:[%s230] sm:$0xff] %vm562, %v546
        %564 = vst.msk [vmem:[%s230 + $0x8] sm:$0xff] %vm562, %v547
        %565 = vst.msk [vmem:[%s230 + $0x10] sm:$0xff] %vm562, %v548
        %566 = vst.msk [vmem:[%s230 + $0x18] sm:$0xff] %vm562, %v549
        %567 = vst.msk [vmem:[%s230 + $0x20] sm:$0xff] %vm562, %v550
        %568 = vst.msk [vmem:[%s230 + $0x28] sm:$0xff] %vm562, %v551
        %569 = vst.msk [vmem:[%s230 + $0x30] sm:$0xff] %vm562, %v552
        %570 = vst.msk [vmem:[%s230 + $0x38] sm:$0xff] %vm562, %v553
        %571 = vst.msk [vmem:[%s230 + $0x40] sm:$0xff] %vm562, %v554
        %572 = vst.msk [vmem:[%s230 + $0x48] sm:$0xff] %vm562, %v555
        %573 = vst.msk [vmem:[%s230 + $0x50] sm:$0xff] %vm562, %v556
        %574 = vst.msk [vmem:[%s230 + $0x58] sm:$0xff] %vm562, %v557
        %575 = vst.msk [vmem:[%s230 + $0x60] sm:$0xff] %vm562, %v558
        %576 = vst.msk [vmem:[%s230 + $0x68] sm:$0xff] %vm562, %v559
        %577 = vst.msk [vmem:[%s230 + $0x70] sm:$0xff] %vm562, %v560
        %578 = vst.msk [vmem:[%s230 + $0x78] sm:$0xff] %vm562, %v561
        %v579 = vld [vmem:[%s235] sm:$0xff]
        %v580 = vld [vmem:[%s235 + $0x8] sm:$0xff]
        %v581 = vld [vmem:[%s235 + $0x10] sm:$0xff]
        %v582 = vld [vmem:[%s235 + $0x18] sm:$0xff]
        %v583 = vld [vmem:[%s235 + $0x20] sm:$0xff]
        %v584 = vld [vmem:[%s235 + $0x28] sm:$0xff]
        %v585 = vld [vmem:[%s235 + $0x30] sm:$0xff]
        %v586 = vld [vmem:[%s235 + $0x38] sm:$0xff]
        %v587 = vld [vmem:[%s235 + $0x40] sm:$0xff]
        %v588 = vld [vmem:[%s235 + $0x48] sm:$0xff]
        %v589 = vld [vmem:[%s235 + $0x50] sm:$0xff]
        %v590 = vld [vmem:[%s235 + $0x58] sm:$0xff]
        %v591 = vld [vmem:[%s235 + $0x60] sm:$0xff]
        %v592 = vld [vmem:[%s235 + $0x68] sm:$0xff]
        %v593 = vld [vmem:[%s235 + $0x70] sm:$0xff]
        %v594 = vld [vmem:[%s235 + $0x78] sm:$0xff]
        %v595 = vmul.f32 %v388, %v388
        %v596 = vmul.f32 %v390, %v390
        %v597 = vmul.f32 %v394, %v394
        %v598 = vmul.f32 %v396, %v396
        %v599 = vmul.f32 %v400, %v400
        %v600 = vmul.f32 %v402, %v402
        %v601 = vmul.f32 %v406, %v406
        %v602 = vmul.f32 %v408, %v408
        %v603 = vmul.f32 %v412, %v412
        %v604 = vmul.f32 %v414, %v414
        %v605 = vmul.f32 %v418, %v418
        %v606 = vmul.f32 %v420, %v420
        %v607 = vmul.f32 %v424, %v424
        %v608 = vmul.f32 %v426, %v426
        %v609 = vmul.f32 %v430, %v430
        %v610 = vmul.f32 %v432, %v432
        %v611 = vmul.f32 %v436, %v436
        %v612 = vmul.f32 %v438, %v438
        %v613 = vmul.f32 %v442, %v442
        %v614 = vmul.f32 %v444, %v444
        %v615 = vmul.f32 %v448, %v448
        %v616 = vmul.f32 %v450, %v450
        %v617 = vmul.f32 %v454, %v454
        %v618 = vmul.f32 %v456, %v456
        %v619 = vmul.f32 %v460, %v460
        %v620 = vmul.f32 %v462, %v462
        %v621 = vmul.f32 %v466, %v466
        %v622 = vmul.f32 %v468, %v468
        %v623 = vmul.f32 %v472, %v472
        %v624 = vmul.f32 %v474, %v474
        %v625 = vmul.f32 %v478, %v478
        %v626 = vmul.f32 %v480, %v480
        %v627 = vadd.f32 %v595, %v596
        %628 = vadd.xlane.f32.xlu0 %v627
        %v629 = vpop.xlane.xlu0 %628
        %v630 = vadd.f32 %v597, %v598
        %631 = vadd.xlane.f32.xlu0 %v630
        %v632 = vpop.xlane.xlu0 %631
        %v633 = vadd.f32 %v599, %v600
        %634 = vadd.xlane.f32.xlu0 %v633
        %v635 = vpop.xlane.xlu0 %634
        %v636 = vadd.f32 %v601, %v602
        %637 = vadd.xlane.f32.xlu0 %v636
        %v638 = vpop.xlane.xlu0 %637
        %v639 = vadd.f32 %v603, %v604
        %640 = vadd.xlane.f32.xlu0 %v639
        %v641 = vpop.xlane.xlu0 %640
        %v642 = vadd.f32 %v605, %v606
        %643 = vadd.xlane.f32.xlu0 %v642
        %v644 = vpop.xlane.xlu0 %643
        %v645 = vadd.f32 %v607, %v608
        %646 = vadd.xlane.f32.xlu0 %v645
        %v647 = vpop.xlane.xlu0 %646
        %v648 = vadd.f32 %v609, %v610
        %649 = vadd.xlane.f32.xlu0 %v648
        %v650 = vpop.xlane.xlu0 %649
        %v651 = vadd.f32 %v611, %v612
        %652 = vadd.xlane.f32.xlu0 %v651
        %v653 = vpop.xlane.xlu0 %652
        %v654 = vadd.f32 %v613, %v614
        %655 = vadd.xlane.f32.xlu0 %v654
        %v656 = vpop.xlane.xlu0 %655
        %v657 = vadd.f32 %v615, %v616
        %658 = vadd.xlane.f32.xlu0 %v657
        %v659 = vpop.xlane.xlu0 %658
        %v660 = vadd.f32 %v617, %v618
        %661 = vadd.xlane.f32.xlu0 %v660
        %v662 = vpop.xlane.xlu0 %661
        %v663 = vadd.f32 %v619, %v620
        %664 = vadd.xlane.f32.xlu0 %v663
        %v665 = vpop.xlane.xlu0 %664
        %v666 = vadd.f32 %v621, %v622
        %667 = vadd.xlane.f32.xlu0 %v666
        %v668 = vpop.xlane.xlu0 %667
        %v669 = vadd.f32 %v623, %v624
        %670 = vadd.xlane.f32.xlu0 %v669
        %v671 = vpop.xlane.xlu0 %670
        %v672 = vadd.f32 %v625, %v626
        %673 = vadd.xlane.f32.xlu0 %v672
        %v674 = vpop.xlane.xlu0 %673
        %v675 = vadd.f32 %v579, %v629
        %v676 = vadd.f32 %v580, %v632
        %v677 = vadd.f32 %v581, %v635
        %v678 = vadd.f32 %v582, %v638
        %v679 = vadd.f32 %v583, %v641
        %v680 = vadd.f32 %v584, %v644
        %v681 = vadd.f32 %v585, %v647
        %v682 = vadd.f32 %v586, %v650
        %v683 = vadd.f32 %v587, %v653
        %v684 = vadd.f32 %v588, %v656
        %v685 = vadd.f32 %v589, %v659
        %v686 = vadd.f32 %v590, %v662
        %v687 = vadd.f32 %v591, %v665
        %v688 = vadd.f32 %v592, %v668
        %v689 = vadd.f32 %v593, %v671
        %v690 = vadd.f32 %v594, %v674
        %691 = vst.msk [vmem:[%s235] sm:$0xff] %vm562, %v675
        %692 = vst.msk [vmem:[%s235 + $0x8] sm:$0xff] %vm562, %v676
        %693 = vst.msk [vmem:[%s235 + $0x10] sm:$0xff] %vm562, %v677
        %694 = vst.msk [vmem:[%s235 + $0x18] sm:$0xff] %vm562, %v678
        %695 = vst.msk [vmem:[%s235 + $0x20] sm:$0xff] %vm562, %v679
        %696 = vst.msk [vmem:[%s235 + $0x28] sm:$0xff] %vm562, %v680
        %697 = vst.msk [vmem:[%s235 + $0x30] sm:$0xff] %vm562, %v681
        %698 = vst.msk [vmem:[%s235 + $0x38] sm:$0xff] %vm562, %v682
        %699 = vst.msk [vmem:[%s235 + $0x40] sm:$0xff] %vm562, %v683
        %700 = vst.msk [vmem:[%s235 + $0x48] sm:$0xff] %vm562, %v684
        %701 = vst.msk [vmem:[%s235 + $0x50] sm:$0xff] %vm562, %v685
        %702 = vst.msk [vmem:[%s235 + $0x58] sm:$0xff] %vm562, %v686
        %703 = vst.msk [vmem:[%s235 + $0x60] sm:$0xff] %vm562, %v687
        %704 = vst.msk [vmem:[%s235 + $0x68] sm:$0xff] %vm562, %v688
        %705 = vst.msk [vmem:[%s235 + $0x70] sm:$0xff] %vm562, %v689
        %706 = vst.msk [vmem:[%s235 + $0x78] sm:$0xff] %vm562, %v690
        %p707 = scmp.lt.s32.totalorder %s23, 1
        %s708 = scalar_select %p707, %s23, 1
        %s709 = smul.addr %s708, 16
        %s710 = smul.addr %s709, 8
        %s711 = scalar_lea.vmem %s2, %s710
        %p712 = scmp.lt.s32.totalorder %s23, 1
        %s713 = scalar_select %p712, %s23, 1
        %s714 = smul.addr %s713, 16
        %s715 = smul.addr %s714, 8
        %s716 = scalar_lea.vmem %s3, %s715
        // Predicated region
        $region41: #{tpu_custom_call.1} parent=27 // pred_check
          %p717 = pneg %p98
        $region42: #{tpu_custom_call.1} parent=27 // pred_check_branch
          %719 = sbr.rel (%p717) target = $region44
        $region43: #{tpu_custom_call.1} parent=27 // pred_region
          _
        $region44: #{tpu_custom_call.1} parent=27 // pred_fallthru
          _
        // Predicated region
        $region45: #{tpu_custom_call.1} parent=27 // pred_check
          %p720 = pneg %p124
        $region46: #{tpu_custom_call.1} parent=27 // pred_check_branch
          %722 = sbr.rel (%p720) target = $region48
        $region47: #{tpu_custom_call.1} parent=27 // pred_region
          _
        $region48: #{tpu_custom_call.1} parent=27 // pred_fallthru
          _
      $region28: #{tpu_custom_call.1} parent=5 // pred_fallthru
        _
      %p723 = scmp.le.s32.totalorder 2, %s14
      // Predicated region
      $region49: #{tpu_custom_call.1} parent=5 // pred_check
        %p724 = pneg %p723
      $region50: #{tpu_custom_call.1} parent=5 // pred_check_branch
        %726 = sbr.rel (%p724) target = $region52
      $region51: #{tpu_custom_call.1} parent=5 // pred_region
        %s727 = ssub.s32 %s14, 2
        // Predicated region
        $region53: #{tpu_custom_call.1} parent=51 // pred_check
          %p728 = pneg %p104
        $region54: #{tpu_custom_call.1} parent=51 // pred_check_branch
          %730 = sbr.rel (%p728) target = $region56
        $region55: #{tpu_custom_call.1} parent=51 // pred_region
          %p731 = scmp.lt.s32.totalorder %s25, 1
          %s732 = scalar_select %p731, %s25, 1
          %s733 = smul.addr %s732, 16
          %s734 = smul.addr %s733, 8
          %s735 = scalar_lea.vmem %s2, %s734
        $region56: #{tpu_custom_call.1} parent=51 // pred_fallthru
          _
        // Predicated region
        $region57: #{tpu_custom_call.1} parent=51 // pred_check
          %p736 = pneg %p130
        $region58: #{tpu_custom_call.1} parent=51 // pred_check_branch
          %738 = sbr.rel (%p736) target = $region60
        $region59: #{tpu_custom_call.1} parent=51 // pred_region
          %p739 = scmp.lt.s32.totalorder %s25, 1
          %s740 = scalar_select %p739, %s25, 1
          %s741 = smul.addr %s740, 16
          %s742 = smul.addr %s741, 8
          %s743 = scalar_lea.vmem %s3, %s742
        $region60: #{tpu_custom_call.1} parent=51 // pred_fallthru
          _
      $region52: #{tpu_custom_call.1} parent=5 // pred_fallthru
        _
    $region6: #{tpu_custom_call.1} parent=1 // loop_footer
      %s18 = sadd.s32 1, %s14
    $region7: #{tpu_custom_call.1} parent=1 // loop_footer_branch
      %13 = sbr.rel target = $region3
    $region8: #{tpu_custom_call.1} parent=1 // loop_exit
      _
    %744 = vsyncpa [#allocation3], 1
    %s745 = scalar_lea.sflag [#allocation3], 1
    %746 = vsyncpa %s745, 1
    %747 = vsyncpa [#allocation5], 1

</llo_original>
